<compile_context>
chip_gen: v7x
topology: tpu7x:2x2x1
jax: 0.10.0
libtpu: 0.0.40
codegen_flags: <defaults>
</compile_context>

<pallas_src>
import jax
import jax.numpy as jnp
from jax.experimental import pallas as pl
from jax.experimental.pallas import tpu as pltpu

input_size = 100
hidden_size = 50
output_size = 10

# Lane-padded (128-multiple) feature dims for the MXU-facing operands.
HID_P = 128
OUT_P = 128


def mlp_kernel(x_ref, w1_ref, b1_ref, w2_ref, b2_ref, o_ref):
    # x: (TB, 100) f32, w1: (100, HID_P) bf16, b1: (1, HID_P) f32
    # w2: (HID_P, OUT_P) bf16, b2: (1, OUT_P) f32, o: (TB, OUT_P) bf16
    x = x_ref[...].astype(jnp.bfloat16)  # cast in-kernel; HBM carries raw f32 rows
    h = jnp.dot(x, w1_ref[...], preferred_element_type=jnp.float32)
    # Fused bias + ReLU on the f32 accumulator; padded hidden lanes are zero -> stay zero.
    h = jnp.maximum(h + b1_ref[...], 0.0)
    h = h.astype(jnp.bfloat16)  # single cast feeding the second MXU matmul
    out = jnp.dot(h, w2_ref[...], preferred_element_type=jnp.float32) + b2_ref[...]
    o_ref[...] = out.astype(o_ref.dtype)  # bf16 store (lane-dense, halves writeback)


def _round_up(n, m):
    return ((n + m - 1) // m) * m


def _pad2(a, rows, cols):
    r, c = a.shape
    return jnp.pad(a, ((0, rows - r), (0, cols - c)))


def simple_nn_forward(x, w1, b1, w2, b2, *, tb=1024):
    """x: (B, input_size) f32; weights in (in, out) layout; returns (B, output_size) f32."""
    B = x.shape[0]

    # Derive the batch tile from the grid so padding stays <= one sublane group:
    #   grid_b = cdiv(B16, tb); TB = round_up(cdiv(B16, grid_b), 16).
    # Force grid_b >= 2 once the batch is big enough so the "parallel" axis has two
    # tiles to shard across v7x's two TensorCores (harmless on v5e/v6e).
    b_pad16 = _round_up(B, 16)
    grid_b = max(1, (b_pad16 + tb - 1) // tb)
    if b_pad16 >= 32 and grid_b < 2:
        grid_b = 2
    TB = _round_up((b_pad16 + grid_b - 1) // grid_b, 16)
    B_pad = TB * grid_b

    # x: pad batch rows only, keep f32 and the raw 100-wide feature dim.
    x_p = jnp.pad(x, ((0, B_pad - B), (0, 0))).astype(jnp.float32)

    # Weights/biases: zero-pad only the hidden/output lanes; padded lanes contribute
    # nothing through bias+ReLU or either matmul.
    w1_p = _pad2(w1, input_size, HID_P).astype(jnp.bfloat16)
    b1_p = _pad2(b1, 1, HID_P).astype(jnp.float32)
    w2_p = _pad2(w2, HID_P, OUT_P).astype(jnp.bfloat16)
    b2_p = _pad2(b2, 1, OUT_P).astype(jnp.float32)

    # Memory-bound kernel: tell XLA roughly how many bytes/flops it moves.
    weight_bytes = (w1_p.size + w2_p.size) * 2 + (b1_p.size + b2_p.size) * 4
    cost = pl.CostEstimate(
        flops=2 * B_pad * (input_size * HID_P + HID_P * OUT_P),
        transcendentals=0,
        bytes_accessed=B_pad * input_size * 4 + B_pad * OUT_P * 2 + weight_bytes,
    )

    out_p = pl.pallas_call(
        mlp_kernel,
        out_shape=jax.ShapeDtypeStruct((B_pad, OUT_P), jnp.bfloat16),
        grid_spec=pltpu.PrefetchScalarGridSpec(
            num_scalar_prefetch=0,
            grid=(grid_b,),
            in_specs=[
                pl.BlockSpec((TB, input_size), lambda i: (i, 0)),   # streamed raw-f32 x tiles
                pl.BlockSpec((input_size, HID_P), lambda i: (0, 0)),  # W1 resident
                pl.BlockSpec((1, HID_P), lambda i: (0, 0)),           # b1 resident
                pl.BlockSpec((HID_P, OUT_P), lambda i: (0, 0)),       # W2 resident
                pl.BlockSpec((1, OUT_P), lambda i: (0, 0)),           # b2 resident
            ],
            out_specs=pl.BlockSpec((TB, OUT_P), lambda i: (i, 0)),    # lane-dense bf16 output
        ),
        compiler_params=pltpu.CompilerParams(
            dimension_semantics=("parallel",),  # independent batch tiles -> megacore
        ),
        cost_estimate=cost,
    )(x_p, w1_p, b1_p, w2_p, b2_p)

    # Strip batch padding and the padded output lanes; upcast after the slice.
    return out_p[:B, :output_size].astype(jnp.float32)


def init_params(key):
    # Deterministic init mimicking nn.Linear's default (uniform in +-1/sqrt(fan_in)).
    k1, k2, k3, k4 = jax.random.split(key, 4)
    bound1 = 1.0 / jnp.sqrt(input_size)
    bound2 = 1.0 / jnp.sqrt(hidden_size)
    w1 = jax.random.uniform(k1, (input_size, hidden_size), jnp.float32, -bound1, bound1)
    b1 = jax.random.uniform(k2, (1, hidden_size), jnp.float32, -bound1, bound1)
    w2 = jax.random.uniform(k3, (hidden_size, output_size), jnp.float32, -bound2, bound2)
    b2 = jax.random.uniform(k4, (1, output_size), jnp.float32, -bound2, bound2)
    return w1, b1, w2, b2


if __name__ == "__main__":
    key = jax.random.PRNGKey(0)
    kx, kp = jax.random.split(key)
    batch = 8
    x = jax.random.normal(kx, (batch, input_size), jnp.float32)
    w1, b1, w2, b2 = init_params(kp)

    out = simple_nn_forward(x, w1, b1, w2, b2)
    out = jax.block_until_ready(out)

    # Reference in plain f32 JAX (kernel uses bf16 weights/activations with f32
    # accumulation and a bf16 output store, so allow bf16-level tolerance).
    ref = jnp.maximum(x @ w1 + b1, 0.0) @ w2 + b2
    assert out.shape == (batch, output_size)
    assert jnp.allclose(out, ref, atol=5e-2, rtol=5e-2), float(jnp.max(jnp.abs(out - ref)))

    print("KERNEL_OK")
</pallas_src>

<mosaic_0001>
module attributes {stable_mosaic.version = 11 : i64} {
  func.func @mlp_kernel(%arg0: i32, %arg1: memref<16x100xf32, #tpu.memory_space<vmem>>, %arg2: memref<100x128xbf16, #tpu.memory_space<vmem>>, %arg3: memref<1x128xf32, #tpu.memory_space<vmem>>, %arg4: memref<128x128xbf16, #tpu.memory_space<vmem>>, %arg5: memref<1x128xf32, #tpu.memory_space<vmem>>, %arg6: memref<16x128xbf16, #tpu.memory_space<vmem>>) attributes {dimension_semantics = [#tpu.dimension_semantics<parallel>], iteration_bounds = array<i64: 1>, scalar_prefetch = 0 : i64, scratch_operands = 0 : i64, tpu.core_type = #tpu.core_type<tc>, window_params = [{transform_indices = @transform_0, window_bounds = array<i64: 16, 100>}, {pipeline_mode = #tpu.pipeline_mode<synchronous>, transform_indices = @transform_1, window_bounds = array<i64: 100, 128>}, {pipeline_mode = #tpu.pipeline_mode<synchronous>, transform_indices = @transform_2, window_bounds = array<i64: 1, 128>}, {pipeline_mode = #tpu.pipeline_mode<synchronous>, transform_indices = @transform_3, window_bounds = array<i64: 128, 128>}, {pipeline_mode = #tpu.pipeline_mode<synchronous>, transform_indices = @transform_4, window_bounds = array<i64: 1, 128>}, {transform_indices = @transform_5, window_bounds = array<i64: 16, 128>}]} {
    %c0 = arith.constant 0 : index
    %c0_0 = arith.constant 0 : index
    %0 = vector.load %arg1[%c0, %c0_0] : memref<16x100xf32, #tpu.memory_space<vmem>>, vector<16x100xf32>
    %1 = arith.truncf %0 : vector<16x100xf32> to vector<16x100xbf16>
    %c0_1 = arith.constant 0 : index
    %c0_2 = arith.constant 0 : index
    %2 = vector.load %arg2[%c0_1, %c0_2] : memref<100x128xbf16, #tpu.memory_space<vmem>>, vector<100x128xbf16>
    %cst = arith.constant dense<0.000000e+00> : vector<16x128xf32>
    %3 = tpu.matmul %1, %2, %cst {dimension_numbers = #tpu.dot_dimension_numbers<[1], [0], [0], [1], [0, 0, 1, 1], [], []>} : vector<16x100xbf16>, vector<100x128xbf16>, vector<16x128xf32> -> vector<16x128xf32>
    %c0_3 = arith.constant 0 : index
    %c0_4 = arith.constant 0 : index
    %4 = vector.load %arg3[%c0_3, %c0_4] : memref<1x128xf32, #tpu.memory_space<vmem>>, vector<1x128xf32>
    %5 = vector.broadcast %4 : vector<1x128xf32> to vector<16x128xf32>
    %6 = arith.addf %3, %5 : vector<16x128xf32>
    %cst_5 = arith.constant 0.000000e+00 : f32
    %7 = vector.broadcast %cst_5 : f32 to vector<16x128xf32>
    %8 = arith.maximumf %6, %7 : vector<16x128xf32>
    %9 = arith.truncf %8 : vector<16x128xf32> to vector<16x128xbf16>
    %c0_6 = arith.constant 0 : index
    %c0_7 = arith.constant 0 : index
    %10 = vector.load %arg4[%c0_6, %c0_7] : memref<128x128xbf16, #tpu.memory_space<vmem>>, vector<128x128xbf16>
    %cst_8 = arith.constant dense<0.000000e+00> : vector<16x128xf32>
    %11 = tpu.matmul %9, %10, %cst_8 {dimension_numbers = #tpu.dot_dimension_numbers<[1], [0], [0], [1], [0, 0, 1, 1], [], []>} : vector<16x128xbf16>, vector<128x128xbf16>, vector<16x128xf32> -> vector<16x128xf32>
    %c0_9 = arith.constant 0 : index
    %c0_10 = arith.constant 0 : index
    %12 = vector.load %arg5[%c0_9, %c0_10] : memref<1x128xf32, #tpu.memory_space<vmem>>, vector<1x128xf32>
    %13 = vector.broadcast %12 : vector<1x128xf32> to vector<16x128xf32>
    %14 = arith.addf %11, %13 : vector<16x128xf32>
    %15 = arith.truncf %14 : vector<16x128xf32> to vector<16x128xbf16>
    %c0_11 = arith.constant 0 : index
    %c0_12 = arith.constant 0 : index
    %16 = vector.load %arg6[%c0_11, %c0_12] : memref<16x128xbf16, #tpu.memory_space<vmem>>, vector<16x128xbf16>
    tpu.vector_store %arg6[%c0_11, %c0_12], %15 {strides = array<i32>} : memref<16x128xbf16, #tpu.memory_space<vmem>>, vector<16x128xbf16>,
    return
  }
  func.func @transform_0(%arg0: i32) -> (i32, i32) {
    %c0_i32 = arith.constant 0 : i32
    %c0_i32_0 = arith.constant 0 : i32
    return %arg0, %c0_i32 : i32, i32
  }
  func.func @transform_1(%arg0: i32) -> (i32, i32) {
    %c0_i32 = arith.constant 0 : i32
    %c0_i32_0 = arith.constant 0 : i32
    %c0_i32_1 = arith.constant 0 : i32
    return %c0_i32, %c0_i32_0 : i32, i32
  }
  func.func @transform_2(%arg0: i32) -> (i32, i32) {
    %c0_i32 = arith.constant 0 : i32
    %c0_i32_0 = arith.constant 0 : i32
    %c0_i32_1 = arith.constant 0 : i32
    return %c0_i32, %c0_i32_0 : i32, i32
  }
  func.func @transform_3(%arg0: i32) -> (i32, i32) {
    %c0_i32 = arith.constant 0 : i32
    %c0_i32_0 = arith.constant 0 : i32
    %c0_i32_1 = arith.constant 0 : i32
    return %c0_i32, %c0_i32_0 : i32, i32
  }
  func.func @transform_4(%arg0: i32) -> (i32, i32) {
    %c0_i32 = arith.constant 0 : i32
    %c0_i32_0 = arith.constant 0 : i32
    %c0_i32_1 = arith.constant 0 : i32
    return %c0_i32, %c0_i32_0 : i32, i32
  }
  func.func @transform_5(%arg0: i32) -> (i32, i32) {
    %c0_i32 = arith.constant 0 : i32
    %c0_i32_0 = arith.constant 0 : i32
    return %arg0, %c0_i32 : i32, i32
  }
}

</mosaic_0001>

<llo_original>
// kernel: tpu_custom_call.1
$region0: #{tpu_custom_call.1}
  #allocation0 [shape = 'u32[]', space=smem, size = 0x4, offset = 0x4, fixed_abs, tag = 'smem constant byte address 0x4 - core index']
  #allocation1 [shape = 'u32[144,128]{1,0:T(1,128)}', space=vmem, size = 0x12000, scoped, tag = 'internal scratch']
  %s0 = inlined_call_operand.hbm [shape: f32[16,100], index: 0, kind: input, shape index: {}]
  %s1 = inlined_call_operand.hbm [shape: bf16[100,128], index: 1, kind: input, shape index: {}]
  %s2 = inlined_call_operand.vmem [shape: f32[1,128], index: 2, kind: input, shape index: {}]
  %s3 = inlined_call_operand.hbm [shape: bf16[128,128], index: 3, kind: input, shape index: {}]
  %s4 = inlined_call_operand.vmem [shape: f32[1,128], index: 4, kind: input, shape index: {}]
  %s5 = inlined_call_operand.hbm [shape: bf16[16,128], index: 5, kind: output, shape index: {}]
  %s6 = sld [smem:[#allocation0]]
  $region42: #{tpu_custom_call.1} parent=0
    _
  %s8 = ssub.s32 1, %s6
  %s9 = scalar_select 0, %s8, %s6
  $region1: #{tpu_custom_call.1} parent=0
    #allocation2 [shape = 'u8[8192]{0}', space=vmem, size = 0x2000, scoped, tag = 'input window, operand 0, single buffered']
    #allocation3 [shape = 's32[1]{0}', space=sflag, size = 0x4, scoped, tag = 'scoped memory for tpu_custom_call.1']
    #allocation4 [shape = 's32[1]{0}', space=sflag, size = 0x4, scoped, tag = 'scoped memory for tpu_custom_call.1']
    #allocation5 [shape = 'u8[26624]{0}', space=vmem, size = 0x6800, scoped, tag = 'input window, operand 1, single buffered']
    #allocation6 [shape = 's32[1]{0}', space=sflag, size = 0x4, scoped, tag = 'scoped memory for tpu_custom_call.1']
    #allocation7 [shape = 'u8[32768]{0}', space=vmem, size = 0x8000, scoped, tag = 'input window, operand 3, single buffered']
    #allocation8 [shape = 'u8[4096]{0}', space=vmem, size = 0x1000, scoped, tag = 'output window, operand 0, single buffered']
    %10 = vsyncpa [#allocation3], 0
    %11 = vsyncpa [#allocation6], 0
    %12 = vsyncpa [#allocation4], 0
    // Predicated region
    $region2: #{tpu_custom_call.1} parent=1 // pred_check
      _
    $region3: #{tpu_custom_call.1} parent=1 // pred_check_branch
      %14 = sbr.rel (0) target = $region5
    $region4: #{tpu_custom_call.1} parent=1 // pred_region
      %s16 = ssub.s32 256, 256
      %17 = vsyncadd [#allocation3], %s16
      %s18 = sshll.u32 [#allocation2], 4
      %s19 = int_to_ptr.vmem [resolvable:$true] %s18
      %24 = dma.hbm_to_vmem [thread:$0]  %s0, 256, %s19, [#allocation3], 128, 128, 8
    $region5: #{tpu_custom_call.1} parent=1 // pred_fallthru
      _
    // Predicated region
    $region6: #{tpu_custom_call.1} parent=1 // pred_check
      _
    $region7: #{tpu_custom_call.1} parent=1 // pred_check_branch
      %26 = sbr.rel (0) target = $region9
    $region8: #{tpu_custom_call.1} parent=1 // pred_region
      %s28 = ssub.s32 832, 832
      %29 = vsyncadd [#allocation6], %s28
      %s30 = sshll.u32 [#allocation5], 4
      %s31 = int_to_ptr.vmem [resolvable:$true] %s30
      %36 = dma.hbm_to_vmem [thread:$0]  %s1, 832, %s31, [#allocation6], 64, 64, 4
    $region9: #{tpu_custom_call.1} parent=1 // pred_fallthru
      _
    // Predicated region
    $region10: #{tpu_custom_call.1} parent=1 // pred_check
      _
    $region11: #{tpu_custom_call.1} parent=1 // pred_check_branch
      %38 = sbr.rel (0) target = $region13
    $region12: #{tpu_custom_call.1} parent=1 // pred_region
      _
    $region13: #{tpu_custom_call.1} parent=1 // pred_fallthru
      _
    // Predicated region
    $region14: #{tpu_custom_call.1} parent=1 // pred_check
      _
    $region15: #{tpu_custom_call.1} parent=1 // pred_check_branch
      %40 = sbr.rel (0) target = $region17
    $region16: #{tpu_custom_call.1} parent=1 // pred_region
      %s42 = ssub.s32 1024, 1024
      %43 = vsyncadd [#allocation6], %s42
      %s44 = sshll.u32 [#allocation7], 4
      %s45 = int_to_ptr.vmem [resolvable:$true] %s44
      %50 = dma.hbm_to_vmem [thread:$0]  %s3, 1024, %s45, [#allocation6], 64, 64, 4
    $region17: #{tpu_custom_call.1} parent=1 // pred_fallthru
      _
    // Predicated region
    $region18: #{tpu_custom_call.1} parent=1 // pred_check
      _
    $region19: #{tpu_custom_call.1} parent=1 // pred_check_branch
      %52 = sbr.rel (0) target = $region21
    $region20: #{tpu_custom_call.1} parent=1 // pred_region
      _
    $region21: #{tpu_custom_call.1} parent=1 // pred_fallthru
      _
    // Predicated region
    $region22: #{tpu_custom_call.1} parent=1 // pred_check
      _
    $region23: #{tpu_custom_call.1} parent=1 // pred_check_branch
      %54 = sbr.rel (0) target = $region25
    $region24: #{tpu_custom_call.1} parent=1 // pred_region
      %55 = dma.done [#allocation3], 256
    $region25: #{tpu_custom_call.1} parent=1 // pred_fallthru
      _
    // Predicated region
    $region26: #{tpu_custom_call.1} parent=1 // pred_check
      _
    $region27: #{tpu_custom_call.1} parent=1 // pred_check_branch
      %57 = sbr.rel (0) target = $region29
    $region28: #{tpu_custom_call.1} parent=1 // pred_region
      %58 = dma.done [#allocation6], 832
    $region29: #{tpu_custom_call.1} parent=1 // pred_fallthru
      _
    // Predicated region
    $region30: #{tpu_custom_call.1} parent=1 // pred_check
      _
    $region31: #{tpu_custom_call.1} parent=1 // pred_check_branch
      %60 = sbr.rel (0) target = $region33
    $region32: #{tpu_custom_call.1} parent=1 // pred_region
      %61 = dma.done [#allocation6], 1024
    $region33: #{tpu_custom_call.1} parent=1 // pred_fallthru
      _
    %v63 = vld [vmem:[#allocation2] sm:$0xff]
    %v64 = vld [vmem:[#allocation2 + $0x8] sm:$0xff]
    %v65 = vpack.c.bf16 %v64, %v63
    %v66 = vld [vmem:[#allocation5] sm:$0xf]
    %v67 = vld [vmem:[#allocation5 + $0x4] sm:$0xf]
    %v68 = vld [vmem:[#allocation5 + $0x8] sm:$0xf]
    %v69 = vld [vmem:[#allocation5 + $0xc] sm:$0xf]
    %v70 = vld [vmem:[#allocation5 + $0x10] sm:$0xf]
    %v71 = vld [vmem:[#allocation5 + $0x14] sm:$0xf]
    %v72 = vld [vmem:[#allocation5 + $0x18] sm:$0xf]
    %v73 = vld [vmem:[#allocation5 + $0x1c] sm:$0xf]
    %v74 = vld [vmem:[#allocation5 + $0x20] sm:$0xf]
    %v75 = vld [vmem:[#allocation5 + $0x24] sm:$0xf]
    %v76 = vld [vmem:[#allocation5 + $0x28] sm:$0xf]
    %v77 = vld [vmem:[#allocation5 + $0x2c] sm:$0xf]
    %v78 = vld [vmem:[#allocation5 + $0x30] sm:$0x3]
    %v79 = vld [vmem:[%s2] sm:$0x1]
    %v81 = vlaneseq
    %v82 = vshrl.u32 %v81, 7
    %v83 = vsub.s32 0, %v82
    %v84 = vrot.slane %v79, %v83
    %v99 = vunpack.c.l.b16 %v66
    %v100 = vunpack.c.l.b16 %v67
    %v101 = vunpack.c.l.b16 %v68
    %v102 = vunpack.c.l.b16 %v69
    %v103 = vunpack.c.l.b16 %v70
    %v104 = vunpack.c.l.b16 %v71
    %v105 = vunpack.c.l.b16 %v72
    %v106 = vunpack.c.l.b16 %v73
    %v107 = vunpack.c.l.b16 %v74
    %v108 = vunpack.c.l.b16 %v75
    %v109 = vunpack.c.l.b16 %v76
    %v110 = vunpack.c.l.b16 %v77
    %v111 = vunpack.c.l.b16 %v78
    %v112 = vpack.c.b16 %v100, %v99
    %v113 = vpack.c.b16 %v102, %v101
    %v114 = vpack.c.b16 %v104, %v103
    %v115 = vpack.c.b16 %v106, %v105
    %v116 = vpack.c.b16 %v108, %v107
    %v117 = vpack.c.b16 %v110, %v109
    %v118 = vpack.c.b16 %v111, %v111
    %vm125 = vcmask 818176
    %v127 = vsel %vm125, %v65, 0
    %vm129 = vcmask 1041408
    %v131 = vsel %vm129, %v118, 0
    %133 = vmatprep.subr.bf16.mxu0 0
    %134 = vmatpush1.bf16.msra.mxu0 %v112
    %135 = vmatprep.subr.bf16.mxu0 0
    %136 = vmatpush1.bf16.msra.mxu0 %v113
    %137 = vmatprep.subr.bf16.mxu0 0
    %138 = vmatpush1.bf16.msra.mxu0 %v114
    %139 = vmatprep.subr.bf16.mxu0 0
    %140 = vmatpush1.bf16.msra.mxu0 %v115
    %141 = vmatprep.subr.bf16.mxu0 0
    %142 = vmatpush1.bf16.msra.mxu0 %v116
    %143 = vmatprep.subr.bf16.mxu0 0
    %144 = vmatpush1.bf16.msra.mxu0 %v117
    %145 = vmatprep.subr.bf16.mxu0 0
    %146 = vmatpush1.bf16.msra.mxu0 %v131
    %147 = vmatprep.subr.bf16.mxu0 0
    %148 = vmatpush1.bf16.msra.mxu0 0
    %149 = vmatprep.subr.bf16.mxu0 0
    %150 = vmatpush1.bf16.msra.mxu0 0
    %151 = vmatprep.subr.bf16.mxu0 0
    %152 = vmatpush1.bf16.msra.mxu0 0
    %153 = vmatprep.subr.bf16.mxu0 0
    %154 = vmatpush1.bf16.msra.mxu0 0
    %155 = vmatprep.subr.bf16.mxu0 0
    %156 = vmatpush1.bf16.msra.mxu0 0
    %157 = vmatprep.subr.bf16.mxu0 0
    %158 = vmatpush1.bf16.msra.mxu0 0
    %159 = vmatprep.subr.bf16.mxu0 0
    %160 = vmatpush1.bf16.msra.mxu0 0
    %161 = vmatprep.subr.bf16.mxu0 0
    %162 = vmatpush1.bf16.msra.mxu0 0
    %163 = vmatprep.subr.bf16.mxu0 0
    %164 = vmatpush1.bf16.msra.mxu0 0
    %165 = vmatprep.mubr.bf16.mxu0 0
    %166 = vmatmul.mubr.bf16.gmra.mrb[0].mxu0 %v127
    %v167 = vpop.f32.mrb[0].mxu0
    %v168 = vadd.f32 %v84, %v167
    %v169 = vpop.f32.mrb[0].mxu0
    %v170 = vpop.f32.mrb[0].mxu0
    %v171 = vadd.f32 %v84, %v170
    %v172 = vpop.f32.mrb[0].mxu0
    %173 = vdwg.mxu0
    %v174 = vmax.f32 %v168, 0.0
    %v175 = vmax.f32 %v171, 0.0
    %v176 = vpack.c.bf16 %v175, %v174
    %v177 = vld [vmem:[#allocation7] sm:$0xf]
    %v178 = vld [vmem:[#allocation7 + $0x4] sm:$0xf]
    %v179 = vld [vmem:[#allocation7 + $0x8] sm:$0xf]
    %v180 = vld [vmem:[#allocation7 + $0xc] sm:$0xf]
    %v181 = vld [vmem:[#allocation7 + $0x10] sm:$0xf]
    %v182 = vld [vmem:[#allocation7 + $0x14] sm:$0xf]
    %v183 = vld [vmem:[#allocation7 + $0x18] sm:$0xf]
    %v184 = vld [vmem:[#allocation7 + $0x1c] sm:$0xf]
    %v185 = vld [vmem:[#allocation7 + $0x20] sm:$0xf]
    %v186 = vld [vmem:[#allocation7 + $0x24] sm:$0xf]
    %v187 = vld [vmem:[#allocation7 + $0x28] sm:$0xf]
    %v188 = vld [vmem:[#allocation7 + $0x2c] sm:$0xf]
    %v189 = vld [vmem:[#allocation7 + $0x30] sm:$0xf]
    %v190 = vld [vmem:[#allocation7 + $0x34] sm:$0xf]
    %v191 = vld [vmem:[#allocation7 + $0x38] sm:$0xf]
    %v192 = vld [vmem:[#allocation7 + $0x3c] sm:$0xf]
    %v193 = vld [vmem:[%s4] sm:$0x1]
    %v195 = vlaneseq
    %v196 = vshrl.u32 %v195, 7
    %v197 = vsub.s32 0, %v196
    %v198 = vrot.slane %v193, %v197
    %v216 = vunpack.c.l.b16 %v177
    %v217 = vunpack.c.l.b16 %v178
    %v218 = vunpack.c.l.b16 %v179
    %v219 = vunpack.c.l.b16 %v180
    %v220 = vunpack.c.l.b16 %v181
    %v221 = vunpack.c.l.b16 %v182
    %v222 = vunpack.c.l.b16 %v183
    %v223 = vunpack.c.l.b16 %v184
    %v224 = vunpack.c.l.b16 %v185
    %v225 = vunpack.c.l.b16 %v186
    %v226 = vunpack.c.l.b16 %v187
    %v227 = vunpack.c.l.b16 %v188
    %v228 = vunpack.c.l.b16 %v189
    %v229 = vunpack.c.l.b16 %v190
    %v230 = vunpack.c.l.b16 %v191
    %v231 = vunpack.c.l.b16 %v192
    %v232 = vpack.c.b16 %v217, %v216
    %v233 = vpack.c.b16 %v219, %v218
    %v234 = vpack.c.b16 %v221, %v220
    %v235 = vpack.c.b16 %v223, %v222
    %v236 = vpack.c.b16 %v225, %v224
    %v237 = vpack.c.b16 %v227, %v226
    %v238 = vpack.c.b16 %v229, %v228
    %v239 = vpack.c.b16 %v231, %v230
    %248 = vmatprep.subr.bf16.mxu0 0
    %249 = vmatpush1.bf16.msra.mxu0 %v232
    %250 = vmatprep.subr.bf16.mxu0 0
    %251 = vmatpush1.bf16.msra.mxu0 %v233
    %252 = vmatprep.subr.bf16.mxu0 0
    %253 = vmatpush1.bf16.msra.mxu0 %v234
    %254 = vmatprep.subr.bf16.mxu0 0
    %255 = vmatpush1.bf16.msra.mxu0 %v235
    %256 = vmatprep.subr.bf16.mxu0 0
    %257 = vmatpush1.bf16.msra.mxu0 %v236
    %258 = vmatprep.subr.bf16.mxu0 0
    %259 = vmatpush1.bf16.msra.mxu0 %v237
    %260 = vmatprep.subr.bf16.mxu0 0
    %261 = vmatpush1.bf16.msra.mxu0 %v238
    %262 = vmatprep.subr.bf16.mxu0 0
    %263 = vmatpush1.bf16.msra.mxu0 %v239
    %264 = vmatprep.subr.bf16.mxu0 0
    %265 = vmatpush1.bf16.msra.mxu0 0
    %266 = vmatprep.subr.bf16.mxu0 0
    %267 = vmatpush1.bf16.msra.mxu0 0
    %268 = vmatprep.subr.bf16.mxu0 0
    %269 = vmatpush1.bf16.msra.mxu0 0
    %270 = vmatprep.subr.bf16.mxu0 0
    %271 = vmatpush1.bf16.msra.mxu0 0
    %272 = vmatprep.subr.bf16.mxu0 0
    %273 = vmatpush1.bf16.msra.mxu0 0
    %274 = vmatprep.subr.bf16.mxu0 0
    %275 = vmatpush1.bf16.msra.mxu0 0
    %276 = vmatprep.subr.bf16.mxu0 0
    %277 = vmatpush1.bf16.msra.mxu0 0
    %278 = vmatprep.subr.bf16.mxu0 0
    %279 = vmatpush1.bf16.msra.mxu0 0
    %280 = vmatprep.mubr.bf16.mxu0 0
    %281 = vmatmul.mubr.bf16.gmra.mrb[0].mxu0 %v176
    %v282 = vpop.f32.mrb[0].mxu0
    %v283 = vadd.f32 %v198, %v282
    %v284 = vpop.f32.mrb[0].mxu0
    %v285 = vpop.f32.mrb[0].mxu0
    %v286 = vadd.f32 %v198, %v285
    %v287 = vpop.f32.mrb[0].mxu0
    %288 = vdwg.mxu0
    %v289 = vpack.c.bf16 %v286, %v283
    %v291 = vunpack.c.l.b16 %v289
    %v292 = vunpack.c.h.b16 %v289
    %v293 = vpack.c.b16 %v291, %v291
    %v294 = vpack.c.b16 %v292, %v292
    %297 = vst [vmem:[#allocation8] sm:$0xf] %v293
    %298 = vst [vmem:[#allocation8 + $0x4] sm:$0xf] %v294
    // Predicated region
    $region34: #{tpu_custom_call.1} parent=1 // pred_check
      _
    $region35: #{tpu_custom_call.1} parent=1 // pred_check_branch
      %300 = sbr.rel (0) target = $region37
    $region36: #{tpu_custom_call.1} parent=1 // pred_region
      %s302 = ssub.s32 128, 128
      %303 = vsyncadd [#allocation4], %s302
      %s304 = sshll.u32 [#allocation8], 4
      %s305 = int_to_ptr.vmem [resolvable:$true] %s304
      %310 = dma.vmem_to_hbm [thread:$0]  %s305, 128, %s5, [#allocation4], 64, 64, 4
    $region37: #{tpu_custom_call.1} parent=1 // pred_fallthru
      _
    // Predicated region
    $region38: #{tpu_custom_call.1} parent=1 // pred_check
      _
    $region39: #{tpu_custom_call.1} parent=1 // pred_check_branch
      %312 = sbr.rel (0) target = $region41
    $region40: #{tpu_custom_call.1} parent=1 // pred_region
      %313 = dma.done [#allocation4], 128
    $region41: #{tpu_custom_call.1} parent=1 // pred_fallthru
      _
    %314 = vsyncpa [#allocation3], 1
    %315 = vsyncpa [#allocation6], 1
    %316 = vsyncpa [#allocation4], 1

</llo_original>
